<compile_context>
chip_gen: v5e
topology: v5e:2x2
jax: 0.10.0
libtpu: 0.0.40
codegen_flags: <defaults>
</compile_context>

<pallas_src>
import math

import jax
import jax.numpy as jnp
from jax.experimental import pallas as pl
from jax.experimental.pallas import tpu as pltpu


def _xavier_uniform(key, shape, fan_in, fan_out, gain=1.414):
    # matches torch.nn.init.xavier_uniform_(weight, gain=1.414) on the (out, in)
    # PyTorch weight; we store the transpose (in, out) so the math is x @ W.
    bound = gain * math.sqrt(6.0 / (fan_in + fan_out))
    return jax.random.uniform(key, shape, jnp.float32, -bound, bound)


def _round_up(x, m):
    return ((x + m - 1) // m) * m


def _critic_kernel(obs_ref, act_ref, w1_ref, b1_ref, w2_ref, b2_ref,
                   w3_ref, b3_ref, o_ref, x_ref):
    obs_dim = obs_ref.shape[1]
    # Fold the concat into VMEM: x = [obs | act] (never materialized in HBM).
    x_ref[:, :obs_dim] = obs_ref[...]
    x_ref[:, obs_dim:] = act_ref[...]
    # h1 = relu(x @ W1 + b1): one MXU pass over the merged K = obs_dim + act_dim.
    h1 = jnp.dot(x_ref[...], w1_ref[...], preferred_element_type=jnp.float32)
    h1 = jnp.maximum(h1 + b1_ref[...], 0.0)
    # h2 = relu(h1 @ W2 + b2): bf16 operands, f32 accumulation.
    h2 = jnp.dot(h1.astype(jnp.bfloat16), w2_ref[...],
                 preferred_element_type=jnp.float32)
    h2 = jnp.maximum(h2 + b2_ref[...], 0.0)
    # Final Linear(H, 1): VPU multiply + cross-lane reduce; b3 scalar from SMEM.
    q = jnp.sum(h2 * w3_ref[...], axis=-1) + b3_ref[0, 0]          # (bm,)
    o_ref[...] = q[None, :]                                        # lane-dense (1, bm)


def _vmem_budget_bytes(bm, obs_dim, act_dim, hidden):
    """Rough VMEM budget: single-buffered resident weights, double-buffered
    per-step tiles, concat scratch and activation temporaries, all padded to
    (sublane, lane) tiles."""
    lane = 128
    in_dim = obs_dim + act_dim
    h_p = _round_up(hidden, lane)
    b = 0
    b += _round_up(in_dim, 16) * h_p * 2            # W1 (bf16, single-buffered)
    b += _round_up(hidden, 16) * h_p * 2            # W2 (bf16, single-buffered)
    b += 3 * 8 * h_p * 4                            # b1, b2, W3 row (f32)
    b += 2 * bm * _round_up(obs_dim, lane) * 2      # obs tiles (double-buffered)
    b += 2 * bm * _round_up(act_dim, lane) * 2      # act tiles (double-buffered)
    b += 2 * 8 * _round_up(bm, lane) * 4            # q output tiles (double-buffered)
    b += bm * _round_up(in_dim, lane) * 2           # x concat scratch (bf16)
    b += 3 * bm * h_p * 4                           # h1/h2 f32 + bf16 temporaries
    return b


def mlp_critic_forward(obs, act, params, *, bm=None):
    """Pallas implementation of MLPCritic.forward -> q_value of shape (B,)."""
    w1, b1, w2, b2, w3_row, b3 = params

    B, obs_dim = obs.shape
    act_dim = act.shape[1]
    in_dim = obs_dim + act_dim
    H = w1.shape[1]
    assert w1.shape == (in_dim, H)

    if bm is None:
        # >= 4 grid steps once B is large enough (feeds both v7x TensorCores via
        # the "parallel" batch axis); bm stays a lane-dense multiple of 128 and
        # is capped at 512 so v5e/v6e amortize the per-step overhead with big
        # tiles.  For B <= 512 this keeps bm = 128.
        bm = min(512, max(128, _round_up(pl.cdiv(B, 4), 128)))
    num_tiles = pl.cdiv(B, bm)
    B_pad = num_tiles * bm

    # bf16 matmul operands (native MXU dtype); accumulation stays f32 in-kernel.
    obs = obs.astype(jnp.bfloat16)
    act = act.astype(jnp.bfloat16)
    if B_pad != B:
        obs = jnp.pad(obs, ((0, B_pad - B), (0, 0)))
        act = jnp.pad(act, ((0, B_pad - B), (0, 0)))

    w1 = w1.astype(jnp.bfloat16)
    w2 = w2.astype(jnp.bfloat16)
    b1 = b1.astype(jnp.float32)
    b2 = b2.astype(jnp.float32)
    w3_row = w3_row.astype(jnp.float32)
    b3 = b3.astype(jnp.float32)

    # Grid-invariant operands: single buffer (constant index_map, no re-fetch).
    resident = dict(pipeline_mode=pl.Buffered(1))

    flops = 2 * B_pad * in_dim * H + 2 * B_pad * H * H + 2 * B_pad * H
    bytes_accessed = (obs.size * 2 + act.size * 2 + w1.size * 2 + w2.size * 2
                      + (b1.size + b2.size + w3_row.size + b3.size) * 4
                      + B_pad * 4)
    cost = pl.CostEstimate(flops=flops, transcendentals=0,
                           bytes_accessed=bytes_accessed)

    # Explicit VMEM budget (with 2x headroom), clamped to [32 MiB, 64 MiB] so it
    # is valid on every generation (v7x physical VMEM is 64 MiB).
    vmem_limit = int(min(max(2 * _vmem_budget_bytes(bm, obs_dim, act_dim, H),
                             32 << 20), 64 << 20))

    out = pl.pallas_call(
        _critic_kernel,
        out_shape=jax.ShapeDtypeStruct((1, B_pad), jnp.float32),
        grid_spec=pltpu.PrefetchScalarGridSpec(
            num_scalar_prefetch=0,
            grid=(num_tiles,),
            in_specs=[
                pl.BlockSpec((bm, obs_dim), lambda i: (i, 0)),          # obs tile
                pl.BlockSpec((bm, act_dim), lambda i: (i, 0)),          # act tile
                pl.BlockSpec((in_dim, H), lambda i: (0, 0), **resident),  # W1
                pl.BlockSpec((1, H), lambda i: (0, 0), **resident),       # b1
                pl.BlockSpec((H, H), lambda i: (0, 0), **resident),       # W2
                pl.BlockSpec((1, H), lambda i: (0, 0), **resident),       # b2
                pl.BlockSpec((1, H), lambda i: (0, 0), **resident),       # W3 row
                pl.BlockSpec(memory_space=pltpu.MemorySpace.SMEM),        # b3 scalar
            ],
            out_specs=pl.BlockSpec((1, bm), lambda i: (0, i)),          # lane-dense q
            scratch_shapes=[pltpu.VMEM((bm, in_dim), jnp.bfloat16)],    # x = [obs|act]
        ),
        compiler_params=pltpu.CompilerParams(
            dimension_semantics=("parallel",),
            vmem_limit_bytes=vmem_limit),
        cost_estimate=cost,
    )(obs, act, w1, b1, w2, b2, w3_row, b3)

    return out.reshape(-1)[:B]                                          # (B,)


def init_params(key, obs_dim, act_dim, hidden):
    k1, k2, k3 = jax.random.split(key, 3)
    in_dim = obs_dim + act_dim
    w1 = _xavier_uniform(k1, (in_dim, hidden), in_dim, hidden)          # stacked [W1_obs; W1_act]
    b1 = jnp.zeros((1, hidden), jnp.float32)
    w2 = _xavier_uniform(k2, (hidden, hidden), hidden, hidden)
    b2 = jnp.zeros((1, hidden), jnp.float32)
    w3_row = _xavier_uniform(k3, (1, hidden), hidden, 1)                # Linear(H, 1) weight as a row
    b3 = jnp.zeros((1, 1), jnp.float32)
    return (w1, b1, w2, b2, w3_row, b3)


if __name__ == "__main__":
    obs_dim, act_dim, hidden = 12, 4, 32
    batch = 16

    key = jax.random.PRNGKey(0)
    kp, ko, ka = jax.random.split(key, 3)

    params = init_params(kp, obs_dim, act_dim, hidden)
    obs = jax.random.normal(ko, (batch, obs_dim), jnp.float32)
    act = jax.random.normal(ka, (batch, act_dim), jnp.float32)

    q = jax.block_until_ready(mlp_critic_forward(obs, act, params))

    # Pure-JAX reference with the same bf16-operand / f32-accumulate numerics
    # (same semantics as the PyTorch module: x @ W.T + b with relu, squeeze(-1)).
    w1, b1, w2, b2, w3_row, b3 = params
    x = jnp.concatenate([obs.astype(jnp.bfloat16), act.astype(jnp.bfloat16)],
                        axis=-1).astype(jnp.float32)
    h = jnp.maximum(x @ w1.astype(jnp.bfloat16).astype(jnp.float32) + b1, 0.0)
    h = h.astype(jnp.bfloat16).astype(jnp.float32)
    h = jnp.maximum(h @ w2.astype(jnp.bfloat16).astype(jnp.float32) + b2, 0.0)
    q_ref = jnp.sum(h * w3_row, axis=-1) + b3[0, 0]

    assert q.shape == (batch,)
    assert jnp.allclose(q, q_ref, atol=1e-2, rtol=1e-2), \
        float(jnp.max(jnp.abs(q - q_ref)))

    print("KERNEL_OK")
</pallas_src>

<mosaic_0001>
module attributes {stable_mosaic.version = 11 : i64} {
  func.func @_critic_kernel(%arg0: i32, %arg1: memref<128x12xbf16, #tpu.memory_space<vmem>>, %arg2: memref<128x4xbf16, #tpu.memory_space<vmem>>, %arg3: memref<16x32xbf16, #tpu.memory_space<vmem>>, %arg4: memref<1x32xf32, #tpu.memory_space<vmem>>, %arg5: memref<32x32xbf16, #tpu.memory_space<vmem>>, %arg6: memref<1x32xf32, #tpu.memory_space<vmem>>, %arg7: memref<1x32xf32, #tpu.memory_space<vmem>>, %arg8: memref<1x1xf32, #tpu.memory_space<smem>>, %arg9: memref<1x128xf32, #tpu.memory_space<vmem>>, %arg10: memref<128x16xbf16, #tpu.memory_space<vmem>>) attributes {dimension_semantics = [#tpu.dimension_semantics<parallel>], iteration_bounds = array<i64: 1>, scalar_prefetch = 0 : i64, scratch_operands = 1 : i64, tpu.core_type = #tpu.core_type<tc>, window_params = [{transform_indices = @transform_0, window_bounds = array<i64: 128, 12>}, {transform_indices = @transform_1, window_bounds = array<i64: 128, 4>}, {pipeline_mode = #tpu.pipeline_mode<synchronous>, transform_indices = @transform_2, window_bounds = array<i64: 16, 32>}, {pipeline_mode = #tpu.pipeline_mode<synchronous>, transform_indices = @transform_3, window_bounds = array<i64: 1, 32>}, {pipeline_mode = #tpu.pipeline_mode<synchronous>, transform_indices = @transform_4, window_bounds = array<i64: 32, 32>}, {pipeline_mode = #tpu.pipeline_mode<synchronous>, transform_indices = @transform_5, window_bounds = array<i64: 1, 32>}, {pipeline_mode = #tpu.pipeline_mode<synchronous>, transform_indices = @transform_6, window_bounds = array<i64: 1, 32>}, {transform_indices = @transform_7, window_bounds = array<i64: 1, 1>}, {transform_indices = @transform_8, window_bounds = array<i64: 1, 128>}]} {
    %c0 = arith.constant 0 : index
    %c0_0 = arith.constant 0 : index
    %0 = vector.load %arg1[%c0, %c0_0] : memref<128x12xbf16, #tpu.memory_space<vmem>>, vector<128x12xbf16>
    %c0_1 = arith.constant 0 : index
    %c0_2 = arith.constant 0 : index
    %1 = vector.load %arg10[%c0_1, %c0_2] : memref<128x16xbf16, #tpu.memory_space<vmem>>, vector<128x12xbf16>
    tpu.vector_store %arg10[%c0_1, %c0_2], %0 {strides = array<i32>} : memref<128x16xbf16, #tpu.memory_space<vmem>>, vector<128x12xbf16>,
    %c0_3 = arith.constant 0 : index
    %c0_4 = arith.constant 0 : index
    %2 = vector.load %arg2[%c0_3, %c0_4] : memref<128x4xbf16, #tpu.memory_space<vmem>>, vector<128x4xbf16>
    %c0_5 = arith.constant 0 : index
    %c12 = arith.constant 12 : index
    %3 = vector.load %arg10[%c0_5, %c12] : memref<128x16xbf16, #tpu.memory_space<vmem>>, vector<128x4xbf16>
    tpu.vector_store %arg10[%c0_5, %c12], %2 {strides = array<i32>} : memref<128x16xbf16, #tpu.memory_space<vmem>>, vector<128x4xbf16>,
    %c0_6 = arith.constant 0 : index
    %c0_7 = arith.constant 0 : index
    %4 = vector.load %arg10[%c0_6, %c0_7] : memref<128x16xbf16, #tpu.memory_space<vmem>>, vector<128x16xbf16>
    %c0_8 = arith.constant 0 : index
    %c0_9 = arith.constant 0 : index
    %5 = vector.load %arg3[%c0_8, %c0_9] : memref<16x32xbf16, #tpu.memory_space<vmem>>, vector<16x32xbf16>
    %cst = arith.constant dense<0.000000e+00> : vector<128x32xf32>
    %6 = tpu.matmul %4, %5, %cst {dimension_numbers = #tpu.dot_dimension_numbers<[1], [0], [0], [1], [0, 0, 1, 1], [], []>} : vector<128x16xbf16>, vector<16x32xbf16>, vector<128x32xf32> -> vector<128x32xf32>
    %c0_10 = arith.constant 0 : index
    %c0_11 = arith.constant 0 : index
    %7 = vector.load %arg4[%c0_10, %c0_11] : memref<1x32xf32, #tpu.memory_space<vmem>>, vector<1x32xf32>
    %8 = vector.broadcast %7 : vector<1x32xf32> to vector<128x32xf32>
    %9 = arith.addf %6, %8 : vector<128x32xf32>
    %cst_12 = arith.constant 0.000000e+00 : f32
    %10 = vector.broadcast %cst_12 : f32 to vector<128x32xf32>
    %11 = arith.maximumf %9, %10 : vector<128x32xf32>
    %12 = arith.truncf %11 : vector<128x32xf32> to vector<128x32xbf16>
    %c0_13 = arith.constant 0 : index
    %c0_14 = arith.constant 0 : index
    %13 = vector.load %arg5[%c0_13, %c0_14] : memref<32x32xbf16, #tpu.memory_space<vmem>>, vector<32x32xbf16>
    %cst_15 = arith.constant dense<0.000000e+00> : vector<128x32xf32>
    %14 = tpu.matmul %12, %13, %cst_15 {dimension_numbers = #tpu.dot_dimension_numbers<[1], [0], [0], [1], [0, 0, 1, 1], [], []>} : vector<128x32xbf16>, vector<32x32xbf16>, vector<128x32xf32> -> vector<128x32xf32>
    %c0_16 = arith.constant 0 : index
    %c0_17 = arith.constant 0 : index
    %15 = vector.load %arg6[%c0_16, %c0_17] : memref<1x32xf32, #tpu.memory_space<vmem>>, vector<1x32xf32>
    %16 = vector.broadcast %15 : vector<1x32xf32> to vector<128x32xf32>
    %17 = arith.addf %14, %16 : vector<128x32xf32>
    %cst_18 = arith.constant 0.000000e+00 : f32
    %18 = vector.broadcast %cst_18 : f32 to vector<128x32xf32>
    %19 = arith.maximumf %17, %18 : vector<128x32xf32>
    %c0_19 = arith.constant 0 : index
    %c0_20 = arith.constant 0 : index
    %20 = vector.load %arg7[%c0_19, %c0_20] : memref<1x32xf32, #tpu.memory_space<vmem>>, vector<1x32xf32>
    %21 = vector.broadcast %20 : vector<1x32xf32> to vector<128x32xf32>
    %22 = arith.mulf %19, %21 : vector<128x32xf32>
    %cst_21 = arith.constant dense<0.000000e+00> : vector<128xf32>
    %23 = vector.multi_reduction <add>, %22, %cst_21 [1] : vector<128x32xf32> to vector<128xf32>
    %c0_22 = arith.constant 0 : index
    %c0_23 = arith.constant 0 : index
    %24 = memref.load %arg8[%c0_22, %c0_23] : memref<1x1xf32, #tpu.memory_space<smem>>
    %25 = vector.broadcast %24 : f32 to vector<128xf32>
    %26 = arith.addf %23, %25 : vector<128xf32>
    %27 = vector.shape_cast %26 : vector<128xf32> to vector<1x128xf32>
    %c0_24 = arith.constant 0 : index
    %c0_25 = arith.constant 0 : index
    %28 = vector.load %arg9[%c0_24, %c0_25] : memref<1x128xf32, #tpu.memory_space<vmem>>, vector<1x128xf32>
    tpu.vector_store %arg9[%c0_24, %c0_25], %27 {strides = array<i32>} : memref<1x128xf32, #tpu.memory_space<vmem>>, vector<1x128xf32>,
    return
  }
  func.func @transform_0(%arg0: i32) -> (i32, i32) {
    %c0_i32 = arith.constant 0 : i32
    %c0_i32_0 = arith.constant 0 : i32
    return %arg0, %c0_i32 : i32, i32
  }
  func.func @transform_1(%arg0: i32) -> (i32, i32) {
    %c0_i32 = arith.constant 0 : i32
    %c0_i32_0 = arith.constant 0 : i32
    return %arg0, %c0_i32 : i32, i32
  }
  func.func @transform_2(%arg0: i32) -> (i32, i32) {
    %c0_i32 = arith.constant 0 : i32
    %c0_i32_0 = arith.constant 0 : i32
    %c0_i32_1 = arith.constant 0 : i32
    return %c0_i32, %c0_i32_0 : i32, i32
  }
  func.func @transform_3(%arg0: i32) -> (i32, i32) {
    %c0_i32 = arith.constant 0 : i32
    %c0_i32_0 = arith.constant 0 : i32
    %c0_i32_1 = arith.constant 0 : i32
    return %c0_i32, %c0_i32_0 : i32, i32
  }
  func.func @transform_4(%arg0: i32) -> (i32, i32) {
    %c0_i32 = arith.constant 0 : i32
    %c0_i32_0 = arith.constant 0 : i32
    %c0_i32_1 = arith.constant 0 : i32
    return %c0_i32, %c0_i32_0 : i32, i32
  }
  func.func @transform_5(%arg0: i32) -> (i32, i32) {
    %c0_i32 = arith.constant 0 : i32
    %c0_i32_0 = arith.constant 0 : i32
    %c0_i32_1 = arith.constant 0 : i32
    return %c0_i32, %c0_i32_0 : i32, i32
  }
  func.func @transform_6(%arg0: i32) -> (i32, i32) {
    %c0_i32 = arith.constant 0 : i32
    %c0_i32_0 = arith.constant 0 : i32
    %c0_i32_1 = arith.constant 0 : i32
    return %c0_i32, %c0_i32_0 : i32, i32
  }
  func.func @transform_7(%arg0: i32) -> (i32, i32) {
    %c0_i32 = arith.constant 0 : i32
    %c0_i32_0 = arith.constant 0 : i32
    %c0_i32_1 = arith.constant 0 : i32
    return %c0_i32, %c0_i32_0 : i32, i32
  }
  func.func @transform_8(%arg0: i32) -> (i32, i32) {
    %c0_i32 = arith.constant 0 : i32
    %c0_i32_0 = arith.constant 0 : i32
    return %c0_i32, %arg0 : i32, i32
  }
}

</mosaic_0001>

<llo_original>
// kernel: tpu_custom_call.1
$region0: #{tpu_custom_call.1}
  #allocation0 [shape = 'u32[]', space=smem, size = 0x4, offset = 0x4, fixed_abs, tag = 'smem constant byte address 0x4 - core index']
  #allocation1 [shape = 'u32[72,128]{1,0:T(1,128)}', space=vmem, size = 0x9000, scoped, tag = 'internal scratch']
  #allocation2 [shape = 'bf16[128,16]{1,0:T(8,128)(2,1)}', space=vmem, size = 0x8000, scoped, tag = 'scratch operand']
  #allocation3 [shape = 'f32[1,1]{1,0:T(1,128)S(6)}', space=smem, size = 0x200, scoped, tag = 'scoped memory for tpu_custom_call.1']
  %s0 = inlined_call_operand.vmem [shape: bf16[128,12], index: 0, kind: input, shape index: {}]
  %s1 = inlined_call_operand.vmem [shape: bf16[128,4], index: 1, kind: input, shape index: {}]
  %s2 = inlined_call_operand.vmem [shape: bf16[16,32], index: 2, kind: input, shape index: {}]
  %s3 = inlined_call_operand.vmem [shape: f32[1,32], index: 3, kind: input, shape index: {}]
  %s4 = inlined_call_operand.vmem [shape: bf16[32,32], index: 4, kind: input, shape index: {}]
  %s5 = inlined_call_operand.vmem [shape: f32[1,32], index: 5, kind: input, shape index: {}]
  %s6 = inlined_call_operand.vmem [shape: f32[1,32], index: 6, kind: input, shape index: {}]
  %s7 = inlined_call_operand.<no memory space> [shape: f32[1,1], index: 7, kind: input, shape index: {}]
  %s8 = inlined_call_operand.hbm [shape: f32[1,128], index: 8, kind: output, shape index: {}]
  %s9 = sld [smem:[#allocation0]]
  $region42: #{tpu_custom_call.1} parent=0
    _
  %s11 = ssub.s32 1, %s9
  %s12 = scalar_select 0, %s11, %s9
  %13 = sst [smem:[#allocation3]] %s7
  $region1: #{tpu_custom_call.1} parent=0
    #allocation4 [shape = 'u8[512]{0}', space=vmem, size = 0x400, scoped, tag = 'output window, operand 0, single buffered']
    #allocation5 [shape = 's32[1]{0}', space=sflag, size = 0x4, scoped, tag = 'scoped memory for tpu_custom_call.1']
    %14 = vsyncpa [#allocation5], 0
    // Predicated region
    $region2: #{tpu_custom_call.1} parent=1 // pred_check
      _
    $region3: #{tpu_custom_call.1} parent=1 // pred_check_branch
      %16 = sbr.rel (0) target = $region5
    $region4: #{tpu_custom_call.1} parent=1 // pred_region
      _
    $region5: #{tpu_custom_call.1} parent=1 // pred_fallthru
      _
    // Predicated region
    $region6: #{tpu_custom_call.1} parent=1 // pred_check
      _
    $region7: #{tpu_custom_call.1} parent=1 // pred_check_branch
      %18 = sbr.rel (0) target = $region9
    $region8: #{tpu_custom_call.1} parent=1 // pred_region
      _
    $region9: #{tpu_custom_call.1} parent=1 // pred_fallthru
      _
    // Predicated region
    $region10: #{tpu_custom_call.1} parent=1 // pred_check
      _
    $region11: #{tpu_custom_call.1} parent=1 // pred_check_branch
      %20 = sbr.rel (0) target = $region13
    $region12: #{tpu_custom_call.1} parent=1 // pred_region
      _
    $region13: #{tpu_custom_call.1} parent=1 // pred_fallthru
      _
    // Predicated region
    $region14: #{tpu_custom_call.1} parent=1 // pred_check
      _
    $region15: #{tpu_custom_call.1} parent=1 // pred_check_branch
      %22 = sbr.rel (0) target = $region17
    $region16: #{tpu_custom_call.1} parent=1 // pred_region
      _
    $region17: #{tpu_custom_call.1} parent=1 // pred_fallthru
      _
    // Predicated region
    $region18: #{tpu_custom_call.1} parent=1 // pred_check
      _
    $region19: #{tpu_custom_call.1} parent=1 // pred_check_branch
      %24 = sbr.rel (0) target = $region21
    $region20: #{tpu_custom_call.1} parent=1 // pred_region
      _
    $region21: #{tpu_custom_call.1} parent=1 // pred_fallthru
      _
    // Predicated region
    $region22: #{tpu_custom_call.1} parent=1 // pred_check
      _
    $region23: #{tpu_custom_call.1} parent=1 // pred_check_branch
      %26 = sbr.rel (0) target = $region25
    $region24: #{tpu_custom_call.1} parent=1 // pred_region
      _
    $region25: #{tpu_custom_call.1} parent=1 // pred_fallthru
      _
    // Predicated region
    $region26: #{tpu_custom_call.1} parent=1 // pred_check
      _
    $region27: #{tpu_custom_call.1} parent=1 // pred_check_branch
      %28 = sbr.rel (0) target = $region29
    $region28: #{tpu_custom_call.1} parent=1 // pred_region
      _
    $region29: #{tpu_custom_call.1} parent=1 // pred_fallthru
      _
    // Predicated region
    $region30: #{tpu_custom_call.1} parent=1 // pred_check
      _
    $region31: #{tpu_custom_call.1} parent=1 // pred_check_branch
      %30 = sbr.rel (0) target = $region33
    $region32: #{tpu_custom_call.1} parent=1 // pred_region
      _
    $region33: #{tpu_custom_call.1} parent=1 // pred_fallthru
      _
    %v32 = vld [vmem:[%s0] sm:$0xf]
    %v33 = vld [vmem:[%s0 + $0x4] sm:$0xf]
    %v34 = vld [vmem:[%s0 + $0x8] sm:$0xf]
    %v35 = vld [vmem:[%s0 + $0xc] sm:$0xf]
    %v36 = vld [vmem:[%s0 + $0x10] sm:$0xf]
    %v37 = vld [vmem:[%s0 + $0x14] sm:$0xf]
    %v38 = vld [vmem:[%s0 + $0x18] sm:$0xf]
    %v39 = vld [vmem:[%s0 + $0x1c] sm:$0xf]
    %v40 = vld [vmem:[%s0 + $0x20] sm:$0xf]
    %v41 = vld [vmem:[%s0 + $0x24] sm:$0xf]
    %v42 = vld [vmem:[%s0 + $0x28] sm:$0xf]
    %v43 = vld [vmem:[%s0 + $0x2c] sm:$0xf]
    %v44 = vld [vmem:[%s0 + $0x30] sm:$0xf]
    %v45 = vld [vmem:[%s0 + $0x34] sm:$0xf]
    %v46 = vld [vmem:[%s0 + $0x38] sm:$0xf]
    %v47 = vld [vmem:[%s0 + $0x3c] sm:$0xf]
    %vm48 = vcmask 93184
    %49 = vst.msk [vmem:[#allocation2] sm:$0xf] %vm48, %v32
    %50 = vst.msk [vmem:[#allocation2 + $0x4] sm:$0xf] %vm48, %v33
    %51 = vst.msk [vmem:[#allocation2 + $0x8] sm:$0xf] %vm48, %v34
    %52 = vst.msk [vmem:[#allocation2 + $0xc] sm:$0xf] %vm48, %v35
    %53 = vst.msk [vmem:[#allocation2 + $0x10] sm:$0xf] %vm48, %v36
    %54 = vst.msk [vmem:[#allocation2 + $0x14] sm:$0xf] %vm48, %v37
    %55 = vst.msk [vmem:[#allocation2 + $0x18] sm:$0xf] %vm48, %v38
    %56 = vst.msk [vmem:[#allocation2 + $0x1c] sm:$0xf] %vm48, %v39
    %57 = vst.msk [vmem:[#allocation2 + $0x20] sm:$0xf] %vm48, %v40
    %58 = vst.msk [vmem:[#allocation2 + $0x24] sm:$0xf] %vm48, %v41
    %59 = vst.msk [vmem:[#allocation2 + $0x28] sm:$0xf] %vm48, %v42
    %60 = vst.msk [vmem:[#allocation2 + $0x2c] sm:$0xf] %vm48, %v43
    %61 = vst.msk [vmem:[#allocation2 + $0x30] sm:$0xf] %vm48, %v44
    %62 = vst.msk [vmem:[#allocation2 + $0x34] sm:$0xf] %vm48, %v45
    %63 = vst.msk [vmem:[#allocation2 + $0x38] sm:$0xf] %vm48, %v46
    %64 = vst.msk [vmem:[#allocation2 + $0x3c] sm:$0xf] %vm48, %v47
    %v65 = vld [vmem:[%s1] sm:$0xf]
    %v66 = vld [vmem:[%s1 + $0x4] sm:$0xf]
    %v67 = vld [vmem:[%s1 + $0x8] sm:$0xf]
    %v68 = vld [vmem:[%s1 + $0xc] sm:$0xf]
    %v69 = vld [vmem:[%s1 + $0x10] sm:$0xf]
    %v70 = vld [vmem:[%s1 + $0x14] sm:$0xf]
    %v71 = vld [vmem:[%s1 + $0x18] sm:$0xf]
    %v72 = vld [vmem:[%s1 + $0x1c] sm:$0xf]
    %v73 = vld [vmem:[%s1 + $0x20] sm:$0xf]
    %v74 = vld [vmem:[%s1 + $0x24] sm:$0xf]
    %v75 = vld [vmem:[%s1 + $0x28] sm:$0xf]
    %v76 = vld [vmem:[%s1 + $0x2c] sm:$0xf]
    %v77 = vld [vmem:[%s1 + $0x30] sm:$0xf]
    %v78 = vld [vmem:[%s1 + $0x34] sm:$0xf]
    %v79 = vld [vmem:[%s1 + $0x38] sm:$0xf]
    %v80 = vld [vmem:[%s1 + $0x3c] sm:$0xf]
    %97 = vrot.lane.b32.xlu0 %v65, 12
    %v98 = vpop.permute.xlu0 %97
    %99 = vrot.lane.b32.xlu0 %v66, 12
    %v100 = vpop.permute.xlu0 %99
    %101 = vrot.lane.b32.xlu0 %v67, 12
    %v102 = vpop.permute.xlu0 %101
    %103 = vrot.lane.b32.xlu0 %v68, 12
    %v104 = vpop.permute.xlu0 %103
    %105 = vrot.lane.b32.xlu0 %v69, 12
    %v106 = vpop.permute.xlu0 %105
    %107 = vrot.lane.b32.xlu0 %v70, 12
    %v108 = vpop.permute.xlu0 %107
    %109 = vrot.lane.b32.xlu0 %v71, 12
    %v110 = vpop.permute.xlu0 %109
    %111 = vrot.lane.b32.xlu0 %v72, 12
    %v112 = vpop.permute.xlu0 %111
    %113 = vrot.lane.b32.xlu0 %v73, 12
    %v114 = vpop.permute.xlu0 %113
    %115 = vrot.lane.b32.xlu0 %v74, 12
    %v116 = vpop.permute.xlu0 %115
    %117 = vrot.lane.b32.xlu0 %v75, 12
    %v118 = vpop.permute.xlu0 %117
    %119 = vrot.lane.b32.xlu0 %v76, 12
    %v120 = vpop.permute.xlu0 %119
    %121 = vrot.lane.b32.xlu0 %v77, 12
    %v122 = vpop.permute.xlu0 %121
    %123 = vrot.lane.b32.xlu0 %v78, 12
    %v124 = vpop.permute.xlu0 %123
    %125 = vrot.lane.b32.xlu0 %v79, 12
    %v126 = vpop.permute.xlu0 %125
    %127 = vrot.lane.b32.xlu0 %v80, 12
    %v128 = vpop.permute.xlu0 %127
    %vm145 = vcmask 126048
    %146 = vst.msk [vmem:[#allocation2] sm:$0xf] %vm145, %v98
    %147 = vst.msk [vmem:[#allocation2 + $0x4] sm:$0xf] %vm145, %v100
    %148 = vst.msk [vmem:[#allocation2 + $0x8] sm:$0xf] %vm145, %v102
    %149 = vst.msk [vmem:[#allocation2 + $0xc] sm:$0xf] %vm145, %v104
    %150 = vst.msk [vmem:[#allocation2 + $0x10] sm:$0xf] %vm145, %v106
    %151 = vst.msk [vmem:[#allocation2 + $0x14] sm:$0xf] %vm145, %v108
    %152 = vst.msk [vmem:[#allocation2 + $0x18] sm:$0xf] %vm145, %v110
    %153 = vst.msk [vmem:[#allocation2 + $0x1c] sm:$0xf] %vm145, %v112
    %154 = vst.msk [vmem:[#allocation2 + $0x20] sm:$0xf] %vm145, %v114
    %155 = vst.msk [vmem:[#allocation2 + $0x24] sm:$0xf] %vm145, %v116
    %156 = vst.msk [vmem:[#allocation2 + $0x28] sm:$0xf] %vm145, %v118
    %157 = vst.msk [vmem:[#allocation2 + $0x2c] sm:$0xf] %vm145, %v120
    %158 = vst.msk [vmem:[#allocation2 + $0x30] sm:$0xf] %vm145, %v122
    %159 = vst.msk [vmem:[#allocation2 + $0x34] sm:$0xf] %vm145, %v124
    %160 = vst.msk [vmem:[#allocation2 + $0x38] sm:$0xf] %vm145, %v126
    %161 = vst.msk [vmem:[#allocation2 + $0x3c] sm:$0xf] %vm145, %v128
    %v162 = vld [vmem:[#allocation2] sm:$0xf]
    %v163 = vld [vmem:[#allocation2 + $0x4] sm:$0xf]
    %v164 = vld [vmem:[#allocation2 + $0x8] sm:$0xf]
    %v165 = vld [vmem:[#allocation2 + $0xc] sm:$0xf]
    %v166 = vld [vmem:[#allocation2 + $0x10] sm:$0xf]
    %v167 = vld [vmem:[#allocation2 + $0x14] sm:$0xf]
    %v168 = vld [vmem:[#allocation2 + $0x18] sm:$0xf]
    %v169 = vld [vmem:[#allocation2 + $0x1c] sm:$0xf]
    %v170 = vld [vmem:[#allocation2 + $0x20] sm:$0xf]
    %v171 = vld [vmem:[#allocation2 + $0x24] sm:$0xf]
    %v172 = vld [vmem:[#allocation2 + $0x28] sm:$0xf]
    %v173 = vld [vmem:[#allocation2 + $0x2c] sm:$0xf]
    %v174 = vld [vmem:[#allocation2 + $0x30] sm:$0xf]
    %v175 = vld [vmem:[#allocation2 + $0x34] sm:$0xf]
    %v176 = vld [vmem:[#allocation2 + $0x38] sm:$0xf]
    %v177 = vld [vmem:[#allocation2 + $0x3c] sm:$0xf]
    %v178 = vld [vmem:[%s2] sm:$0xf]
    %v179 = vld [vmem:[%s2 + $0x4] sm:$0xf]
    %v180 = vld [vmem:[%s3] sm:$0x1]
    %v182 = vperm.slane %v180, 0
    %v200 = vunpack.c.l.b16 %v162
    %v201 = vunpack.c.l.b16 %v163
    %v202 = vunpack.c.l.b16 %v164
    %v203 = vunpack.c.l.b16 %v165
    %v204 = vunpack.c.l.b16 %v166
    %v205 = vunpack.c.l.b16 %v167
    %v206 = vunpack.c.l.b16 %v168
    %v207 = vunpack.c.l.b16 %v169
    %v208 = vunpack.c.l.b16 %v170
    %v209 = vunpack.c.l.b16 %v171
    %v210 = vunpack.c.l.b16 %v172
    %v211 = vunpack.c.l.b16 %v173
    %v212 = vunpack.c.l.b16 %v174
    %v213 = vunpack.c.l.b16 %v175
    %v214 = vunpack.c.l.b16 %v176
    %v215 = vunpack.c.l.b16 %v177
    %v216 = vpack.c.b16 %v201, %v200
    %v217 = vpack.c.b16 %v203, %v202
    %v218 = vpack.c.b16 %v205, %v204
    %v219 = vpack.c.b16 %v207, %v206
    %v220 = vpack.c.b16 %v209, %v208
    %v221 = vpack.c.b16 %v211, %v210
    %v222 = vpack.c.b16 %v213, %v212
    %v223 = vpack.c.b16 %v215, %v214
    %v226 = vunpack.c.l.b16 %v178
    %v227 = vunpack.c.l.b16 %v179
    %v228 = vpack.c.b16 %v227, %v226
    %vm230 = vcmask 130048
    %v232 = vsel %vm230, %v216, 0
    %v235 = vsel %vm230, %v217, 0
    %v238 = vsel %vm230, %v218, 0
    %v241 = vsel %vm230, %v219, 0
    %v244 = vsel %vm230, %v220, 0
    %v247 = vsel %vm230, %v221, 0
    %v250 = vsel %vm230, %v222, 0
    %v253 = vsel %vm230, %v223, 0
    %255 = vmatpush.bf16.msra.mxu0 0
    %256 = vmatpush.bf16.msra.mxu0 0
    %257 = vmatpush.bf16.msra.mxu0 0
    %258 = vmatpush.bf16.msra.mxu0 0
    %259 = vmatpush.bf16.msra.mxu0 0
    %260 = vmatpush.bf16.msra.mxu0 0
    %261 = vmatpush.bf16.msra.mxu0 0
    %262 = vmatpush.bf16.msra.mxu0 %v228
    %263 = vmatmul.bf16.gmra.mxu0 %v232
    %v264 = vpop.f32.mrf.mxu0
    %v265 = vadd.f32 %v182, %v264
    %v266 = vpop.f32.mrf.mxu0
    %v267 = vadd.f32 %v182, %v266
    %268 = vmatmul.bf16.gmra.mxu0 %v235
    %v269 = vpop.f32.mrf.mxu0
    %v270 = vadd.f32 %v182, %v269
    %v271 = vpop.f32.mrf.mxu0
    %v272 = vadd.f32 %v182, %v271
    %273 = vmatmul.bf16.gmra.mxu0 %v238
    %v274 = vpop.f32.mrf.mxu0
    %v275 = vadd.f32 %v182, %v274
    %v276 = vpop.f32.mrf.mxu0
    %v277 = vadd.f32 %v182, %v276
    %278 = vmatmul.bf16.gmra.mxu0 %v241
    %v279 = vpop.f32.mrf.mxu0
    %v280 = vadd.f32 %v182, %v279
    %v281 = vpop.f32.mrf.mxu0
    %v282 = vadd.f32 %v182, %v281
    %283 = vmatmul.bf16.gmra.mxu0 %v244
    %v284 = vpop.f32.mrf.mxu0
    %v285 = vadd.f32 %v182, %v284
    %v286 = vpop.f32.mrf.mxu0
    %v287 = vadd.f32 %v182, %v286
    %288 = vmatmul.bf16.gmra.mxu0 %v247
    %v289 = vpop.f32.mrf.mxu0
    %v290 = vadd.f32 %v182, %v289
    %v291 = vpop.f32.mrf.mxu0
    %v292 = vadd.f32 %v182, %v291
    %293 = vmatmul.bf16.gmra.mxu0 %v250
    %v294 = vpop.f32.mrf.mxu0
    %v295 = vadd.f32 %v182, %v294
    %v296 = vpop.f32.mrf.mxu0
    %v297 = vadd.f32 %v182, %v296
    %298 = vmatmul.bf16.gmra.mxu0 %v253
    %v299 = vpop.f32.mrf.mxu0
    %v300 = vadd.f32 %v182, %v299
    %v301 = vpop.f32.mrf.mxu0
    %v302 = vadd.f32 %v182, %v301
    %303 = vdwg.mxu0
    %v304 = vmax.f32 %v265, 0.0
    %v305 = vmax.f32 %v267, 0.0
    %v306 = vmax.f32 %v270, 0.0
    %v307 = vmax.f32 %v272, 0.0
    %v308 = vmax.f32 %v275, 0.0
    %v309 = vmax.f32 %v277, 0.0
    %v310 = vmax.f32 %v280, 0.0
    %v311 = vmax.f32 %v282, 0.0
    %v312 = vmax.f32 %v285, 0.0
    %v313 = vmax.f32 %v287, 0.0
    %v314 = vmax.f32 %v290, 0.0
    %v315 = vmax.f32 %v292, 0.0
    %v316 = vmax.f32 %v295, 0.0
    %v317 = vmax.f32 %v297, 0.0
    %v318 = vmax.f32 %v300, 0.0
    %v319 = vmax.f32 %v302, 0.0
    %v320 = vpack.c.bf16 %v305, %v304
    %v321 = vpack.c.bf16 %v307, %v306
    %v322 = vpack.c.bf16 %v309, %v308
    %v323 = vpack.c.bf16 %v311, %v310
    %v324 = vpack.c.bf16 %v313, %v312
    %v325 = vpack.c.bf16 %v315, %v314
    %v326 = vpack.c.bf16 %v317, %v316
    %v327 = vpack.c.bf16 %v319, %v318
    %v328 = vld [vmem:[%s4] sm:$0xf]
    %v329 = vld [vmem:[%s4 + $0x4] sm:$0xf]
    %v330 = vld [vmem:[%s4 + $0x8] sm:$0xf]
    %v331 = vld [vmem:[%s4 + $0xc] sm:$0xf]
    %v332 = vld [vmem:[%s5] sm:$0x1]
    %v334 = vperm.slane %v332, 0
    %v340 = vunpack.c.l.b16 %v328
    %v341 = vunpack.c.l.b16 %v329
    %v342 = vunpack.c.l.b16 %v330
    %v343 = vunpack.c.l.b16 %v331
    %v344 = vpack.c.b16 %v341, %v340
    %v345 = vpack.c.b16 %v343, %v342
    %vm348 = vcmask 261120
    %v350 = vsel %vm348, %v320, 0
    %v353 = vsel %vm348, %v321, 0
    %v356 = vsel %vm348, %v322, 0
    %v359 = vsel %vm348, %v323, 0
    %v362 = vsel %vm348, %v324, 0
    %v365 = vsel %vm348, %v325, 0
    %v368 = vsel %vm348, %v326, 0
    %v371 = vsel %vm348, %v327, 0
    %373 = vmatpush.bf16.msra.mxu0 0
    %374 = vmatpush.bf16.msra.mxu0 0
    %375 = vmatpush.bf16.msra.mxu0 0
    %376 = vmatpush.bf16.msra.mxu0 0
    %377 = vmatpush.bf16.msra.mxu0 0
    %378 = vmatpush.bf16.msra.mxu0 0
    %379 = vmatpush.bf16.msra.mxu0 %v345
    %380 = vmatpush.bf16.msra.mxu0 %v344
    %381 = vmatmul.bf16.gmra.mxu0 %v350
    %v382 = vpop.f32.mrf.mxu0
    %v383 = vadd.f32 %v334, %v382
    %v384 = vpop.f32.mrf.mxu0
    %v385 = vadd.f32 %v334, %v384
    %386 = vmatmul.bf16.gmra.mxu0 %v353
    %v387 = vpop.f32.mrf.mxu0
    %v388 = vadd.f32 %v334, %v387
    %v389 = vpop.f32.mrf.mxu0
    %v390 = vadd.f32 %v334, %v389
    %391 = vmatmul.bf16.gmra.mxu0 %v356
    %v392 = vpop.f32.mrf.mxu0
    %v393 = vadd.f32 %v334, %v392
    %v394 = vpop.f32.mrf.mxu0
    %v395 = vadd.f32 %v334, %v394
    %396 = vmatmul.bf16.gmra.mxu0 %v359
    %v397 = vpop.f32.mrf.mxu0
    %v398 = vadd.f32 %v334, %v397
    %v399 = vpop.f32.mrf.mxu0
    %v400 = vadd.f32 %v334, %v399
    %401 = vmatmul.bf16.gmra.mxu0 %v362
    %v402 = vpop.f32.mrf.mxu0
    %v403 = vadd.f32 %v334, %v402
    %v404 = vpop.f32.mrf.mxu0
    %v405 = vadd.f32 %v334, %v404
    %406 = vmatmul.bf16.gmra.mxu0 %v365
    %v407 = vpop.f32.mrf.mxu0
    %v408 = vadd.f32 %v334, %v407
    %v409 = vpop.f32.mrf.mxu0
    %v410 = vadd.f32 %v334, %v409
    %411 = vmatmul.bf16.gmra.mxu0 %v368
    %v412 = vpop.f32.mrf.mxu0
    %v413 = vadd.f32 %v334, %v412
    %v414 = vpop.f32.mrf.mxu0
    %v415 = vadd.f32 %v334, %v414
    %416 = vmatmul.bf16.gmra.mxu0 %v371
    %v417 = vpop.f32.mrf.mxu0
    %v418 = vadd.f32 %v334, %v417
    %v419 = vpop.f32.mrf.mxu0
    %v420 = vadd.f32 %v334, %v419
    %421 = vdwg.mxu0
    %v422 = vmax.f32 %v383, 0.0
    %v423 = vmax.f32 %v385, 0.0
    %v424 = vmax.f32 %v388, 0.0
    %v425 = vmax.f32 %v390, 0.0
    %v426 = vmax.f32 %v393, 0.0
    %v427 = vmax.f32 %v395, 0.0
    %v428 = vmax.f32 %v398, 0.0
    %v429 = vmax.f32 %v400, 0.0
    %v430 = vmax.f32 %v403, 0.0
    %v431 = vmax.f32 %v405, 0.0
    %v432 = vmax.f32 %v408, 0.0
    %v433 = vmax.f32 %v410, 0.0
    %v434 = vmax.f32 %v413, 0.0
    %v435 = vmax.f32 %v415, 0.0
    %v436 = vmax.f32 %v418, 0.0
    %v437 = vmax.f32 %v420, 0.0
    %v438 = vld [vmem:[%s6] sm:$0x1]
    %v440 = vperm.slane %v438, 0
    %v442 = vmul.f32 %v422, %v440
    %v443 = vmul.f32 %v423, %v440
    %v444 = vmul.f32 %v424, %v440
    %v445 = vmul.f32 %v425, %v440
    %v446 = vmul.f32 %v426, %v440
    %v447 = vmul.f32 %v427, %v440
    %v448 = vmul.f32 %v428, %v440
    %v449 = vmul.f32 %v429, %v440
    %v450 = vmul.f32 %v430, %v440
    %v451 = vmul.f32 %v431, %v440
    %v452 = vmul.f32 %v432, %v440
    %v453 = vmul.f32 %v433, %v440
    %v454 = vmul.f32 %v434, %v440
    %v455 = vmul.f32 %v435, %v440
    %v456 = vmul.f32 %v436, %v440
    %v457 = vmul.f32 %v437, %v440
    %v458 = vsel %vm348, %v442, 0.0
    %459 = vadd.xlane.f32.xlu0 %v458
    %v460 = vpop.xlane.xlu0 %459
    %v461 = vsel %vm348, %v443, 0.0
    %462 = vadd.xlane.f32.xlu0 %v461
    %v463 = vpop.xlane.xlu0 %462
    %v464 = vsel %vm348, %v444, 0.0
    %465 = vadd.xlane.f32.xlu0 %v464
    %v466 = vpop.xlane.xlu0 %465
    %v467 = vsel %vm348, %v445, 0.0
    %468 = vadd.xlane.f32.xlu0 %v467
    %v469 = vpop.xlane.xlu0 %468
    %v470 = vsel %vm348, %v446, 0.0
    %471 = vadd.xlane.f32.xlu0 %v470
    %v472 = vpop.xlane.xlu0 %471
    %v473 = vsel %vm348, %v447, 0.0
    %474 = vadd.xlane.f32.xlu0 %v473
    %v475 = vpop.xlane.xlu0 %474
    %v476 = vsel %vm348, %v448, 0.0
    %477 = vadd.xlane.f32.xlu0 %v476
    %v478 = vpop.xlane.xlu0 %477
    %v479 = vsel %vm348, %v449, 0.0
    %480 = vadd.xlane.f32.xlu0 %v479
    %v481 = vpop.xlane.xlu0 %480
    %v482 = vsel %vm348, %v450, 0.0
    %483 = vadd.xlane.f32.xlu0 %v482
    %v484 = vpop.xlane.xlu0 %483
    %v485 = vsel %vm348, %v451, 0.0
    %486 = vadd.xlane.f32.xlu0 %v485
    %v487 = vpop.xlane.xlu0 %486
    %v488 = vsel %vm348, %v452, 0.0
    %489 = vadd.xlane.f32.xlu0 %v488
    %v490 = vpop.xlane.xlu0 %489
    %v491 = vsel %vm348, %v453, 0.0
    %492 = vadd.xlane.f32.xlu0 %v491
    %v493 = vpop.xlane.xlu0 %492
    %v494 = vsel %vm348, %v454, 0.0
    %495 = vadd.xlane.f32.xlu0 %v494
    %v496 = vpop.xlane.xlu0 %495
    %v497 = vsel %vm348, %v455, 0.0
    %498 = vadd.xlane.f32.xlu0 %v497
    %v499 = vpop.xlane.xlu0 %498
    %v500 = vsel %vm348, %v456, 0.0
    %501 = vadd.xlane.f32.xlu0 %v500
    %v502 = vpop.xlane.xlu0 %501
    %v503 = vsel %vm348, %v457, 0.0
    %504 = vadd.xlane.f32.xlu0 %v503
    %v505 = vpop.xlane.xlu0 %504
    %s506 = sld [smem:[#allocation3]]
    %v507 = vstv %s506
    %v508 = vadd.f32 %v460, %v507
    %v509 = vadd.f32 %v463, %v507
    %v510 = vadd.f32 %v466, %v507
    %v511 = vadd.f32 %v469, %v507
    %v512 = vadd.f32 %v472, %v507
    %v513 = vadd.f32 %v475, %v507
    %v514 = vadd.f32 %v478, %v507
    %v515 = vadd.f32 %v481, %v507
    %v516 = vadd.f32 %v484, %v507
    %v517 = vadd.f32 %v487, %v507
    %v518 = vadd.f32 %v490, %v507
    %v519 = vadd.f32 %v493, %v507
    %v520 = vadd.f32 %v496, %v507
    %v521 = vadd.f32 %v499, %v507
    %v522 = vadd.f32 %v502, %v507
    %v523 = vadd.f32 %v505, %v507
    %v540 = vlaneseq
    %v541 = vand.u32 %v540, 127
    %v542 = vperm.slane %v508, %v541
    %v543 = vadd.s32 %v541, 4294967288
    %v544 = vperm.slane %v509, %v543
    %vm545 = vcmask 130112
    %v546 = vsel %vm545, %v544, %v542
    %v547 = vadd.s32 %v541, 4294967280
    %v548 = vperm.slane %v510, %v547
    %vm549 = vcmask 195712
    %v550 = vsel %vm549, %v548, %v546
    %v551 = vadd.s32 %v541, 4294967272
    %v552 = vperm.slane %v511, %v551
    %vm553 = vcmask 261312
    %v554 = vsel %vm553, %v552, %v550
    %v555 = vadd.s32 %v541, 4294967264
    %v556 = vperm.slane %v512, %v555
    %vm557 = vcmask 326912
    %v558 = vsel %vm557, %v556, %v554
    %v559 = vadd.s32 %v541, 4294967256
    %v560 = vperm.slane %v513, %v559
    %vm561 = vcmask 392512
    %v562 = vsel %vm561, %v560, %v558
    %v563 = vadd.s32 %v541, 4294967248
    %v564 = vperm.slane %v514, %v563
    %vm565 = vcmask 458112
    %v566 = vsel %vm565, %v564, %v562
    %v567 = vadd.s32 %v541, 4294967240
    %v568 = vperm.slane %v515, %v567
    %vm569 = vcmask 523712
    %v570 = vsel %vm569, %v568, %v566
    %v571 = vadd.s32 %v541, 4294967232
    %v572 = vperm.slane %v516, %v571
    %vm573 = vcmask 589312
    %v574 = vsel %vm573, %v572, %v570
    %v575 = vadd.s32 %v541, 4294967224
    %v576 = vperm.slane %v517, %v575
    %vm577 = vcmask 654912
    %v578 = vsel %vm577, %v576, %v574
    %v579 = vadd.s32 %v541, 4294967216
    %v580 = vperm.slane %v518, %v579
    %vm581 = vcmask 720512
    %v582 = vsel %vm581, %v580, %v578
    %v583 = vadd.s32 %v541, 4294967208
    %v584 = vperm.slane %v519, %v583
    %vm585 = vcmask 786112
    %v586 = vsel %vm585, %v584, %v582
    %v587 = vadd.s32 %v541, 4294967200
    %v588 = vperm.slane %v520, %v587
    %vm589 = vcmask 851712
    %v590 = vsel %vm589, %v588, %v586
    %v591 = vadd.s32 %v541, 4294967192
    %v592 = vperm.slane %v521, %v591
    %vm593 = vcmask 917312
    %v594 = vsel %vm593, %v592, %v590
    %v595 = vadd.s32 %v541, 4294967184
    %v596 = vperm.slane %v522, %v595
    %vm597 = vcmask 982912
    %v598 = vsel %vm597, %v596, %v594
    %v599 = vadd.s32 %v541, 4294967176
    %v600 = vperm.slane %v523, %v599
    %vm601 = vcmask 1048512
    %v602 = vsel %vm601, %v600, %v598
    %604 = vst [vmem:[#allocation4] sm:$0x1] %v602
    // Predicated region
    $region34: #{tpu_custom_call.1} parent=1 // pred_check
      _
    $region35: #{tpu_custom_call.1} parent=1 // pred_check_branch
      %606 = sbr.rel (0) target = $region37
    $region36: #{tpu_custom_call.1} parent=1 // pred_region
      %608 = vsyncadd [#allocation5], 0
      %s610 = sshll.u32 [#allocation4], 4
      %s611 = int_to_ptr.vmem [resolvable:$true] %s610
      %s612 = sshll.u32 %s8, 4
      %s613 = int_to_ptr.hbm [resolvable:$true] %s612
      %615 = dma.vmem_to_hbm [thread:$0]  %s611, 16, %s613, [#allocation5]
    $region37: #{tpu_custom_call.1} parent=1 // pred_fallthru
      _
    // Predicated region
    $region38: #{tpu_custom_call.1} parent=1 // pred_check
      _
    $region39: #{tpu_custom_call.1} parent=1 // pred_check_branch
      %617 = sbr.rel (0) target = $region41
    $region40: #{tpu_custom_call.1} parent=1 // pred_region
      %619 = dma.done [#allocation5], 16
    $region41: #{tpu_custom_call.1} parent=1 // pred_fallthru
      _
    %620 = vsyncpa [#allocation5], 1

</llo_original>
